<compile_context>
chip_gen: v5e
topology: v5e:2x2
jax: 0.10.0
libtpu: 0.0.40
codegen_flags: <defaults>
</compile_context>

<pallas_src>
import functools

import jax
import jax.numpy as jnp
from jax.experimental import pallas as pl
from jax.experimental.pallas import tpu as pltpu

LANES = 128
SUBLANES = 8
MAX_TILE_ROWS = 1024  # 1024*128*4B = 512 KiB per f32 input buffer (x2 inputs x2 bufs = 2 MiB)


def _round_up(a, b):
    return pl.cdiv(a, b) * b


def _int_pow(x, n):
    """x**n for non-negative integer n via repeated VPU multiplies (no EUP exp/log)."""
    out = None
    base = x
    while n > 0:
        if n & 1:
            out = base if out is None else out * base
        n >>= 1
        if n:
            base = base * base
    return jnp.ones_like(x) if out is None else out


def _focal_terms(x, t, alpha, gamma, logits):
    """Elementwise focal-loss terms, computed in f32 (VPU/EUP)."""
    if logits:
        # numerically stable BCE-with-logits (matches F.binary_cross_entropy_with_logits)
        bce = jnp.maximum(x, 0.0) - x * t + jnp.log1p(jnp.exp(-jnp.abs(x)))
    else:
        # F.binary_cross_entropy clamps log at -100
        logp = jnp.maximum(jnp.log(x), -100.0)
        log1mp = jnp.maximum(jnp.log(1.0 - x), -100.0)
        bce = -(t * logp + (1.0 - t) * log1mp)
    pt = jnp.exp(-bce)
    one_minus_pt = 1.0 - pt
    g = float(gamma)
    if g == int(g) and 0 <= int(g) <= 16:
        pw = _int_pow(one_minus_pt, int(g))     # integer gamma: pure VPU
    else:
        pw = one_minus_pt ** g                  # fallback: exp/log on EUP
    return alpha * pw * bce


def _focal_sum_kernel(x_ref, t_ref, part_ref, *, alpha, gamma, logits,
                      total, tile_rows, tiles_per_chunk, apply_mask):
    """Per-chunk partial-sum accumulation. Grid = (n_chunks parallel, tiles arbitrary)."""
    i = pl.program_id(1)

    @pl.when(i == 0)
    def _():
        part_ref[...] = jnp.zeros_like(part_ref)

    fl = _focal_terms(x_ref[...].astype(jnp.float32),
                      t_ref[...].astype(jnp.float32),
                      alpha, gamma, logits)

    if apply_mask:
        # Only compiled in when the compute domain extends past the true element
        # count (ragged tail / partial last tile). Positions >= total are zeroed;
        # NaN/Inf from out-of-bounds garbage never leak (where is a select).
        c = pl.program_id(0)
        base = (c * tiles_per_chunk + i) * (tile_rows * LANES)   # fits int32 for <2^31 elems
        ridx = jax.lax.broadcasted_iota(jnp.int32, (tile_rows, LANES), 0)
        lidx = jax.lax.broadcasted_iota(jnp.int32, (tile_rows, LANES), 1)
        fl = jnp.where(base + ridx * LANES + lidx < total, fl, 0.0)

    # Vector-shaped accumulation: reshape regroups sublane rows (no relayout); the
    # sum over the leading (vreg-group) axis is plain elementwise VPU adds.
    part_ref[...] += fl.reshape(tile_rows // SUBLANES, SUBLANES, LANES).sum(axis=0)


def _focal_elem_kernel(x_ref, t_ref, o_ref, *, alpha, gamma, logits):
    fl = _focal_terms(x_ref[...].astype(jnp.float32),
                      t_ref[...].astype(jnp.float32),
                      alpha, gamma, logits)
    o_ref[...] = fl.astype(o_ref.dtype)


def focal_loss(inputs, targets, alpha=1.0, gamma=2.0, logits=False, reduce=True,
               max_tile_rows=MAX_TILE_ROWS):
    """Pallas implementation of FocalLoss.forward."""
    orig_shape = inputs.shape
    orig_dtype = inputs.dtype
    total = int(inputs.size)

    # Flatten is a free view; keep native dtype (kernel casts to f32 internally).
    flat_x = inputs.reshape(-1)
    flat_t = targets.reshape(-1)

    rows = pl.cdiv(total, LANES)
    rows8 = _round_up(rows, SUBLANES)       # physical rows of the 2-D slab
    pad = rows8 * LANES - total             # > 0 only when total % (8*128) != 0

    if pad > 0:
        # Pad with 0.5 so the non-logits log() path stays finite; these elements are
        # masked (reduce=True) or sliced off (reduce=False) anyway.
        flat_x = jnp.pad(flat_x, (0, pad), constant_values=0.5)
        flat_t = jnp.pad(flat_t, (0, pad))

    x2 = flat_x.reshape(rows8, LANES)
    t2 = flat_t.reshape(rows8, LANES)

    tile_rows = min(_round_up(max(int(max_tile_rows), 1), SUBLANES), rows8)
    num_tiles = pl.cdiv(rows8, tile_rows)   # last tile may be partial -> no HBM pad copy

    if reduce:
        # Split tiles across chunks so the leading 'parallel' axis can use both TCs (v7x).
        n_chunks = 2 if (num_tiles >= 2 and num_tiles % 2 == 0) else 1
        tiles_per_chunk = num_tiles // n_chunks
        domain = num_tiles * tile_rows * LANES      # elements covered by the grid

        kernel = functools.partial(
            _focal_sum_kernel, alpha=float(alpha), gamma=float(gamma),
            logits=logits, total=total, tile_rows=tile_rows,
            tiles_per_chunk=tiles_per_chunk, apply_mask=(domain > total))

        partials = pl.pallas_call(
            kernel,
            out_shape=jax.ShapeDtypeStruct((n_chunks * SUBLANES, LANES), jnp.float32),
            grid_spec=pltpu.PrefetchScalarGridSpec(
                num_scalar_prefetch=0,
                grid=(n_chunks, tiles_per_chunk),
                in_specs=[pl.BlockSpec(
                    (tile_rows, LANES),
                    lambda c, i: (c * tiles_per_chunk + i, 0))] * 2,
                out_specs=pl.BlockSpec((SUBLANES, LANES), lambda c, i: (c, 0)),
            ),
            compiler_params=pltpu.CompilerParams(
                dimension_semantics=("parallel", "arbitrary")),
        )(x2, t2)
        # Tiny final reduction + mean outside the kernel.
        return jnp.sum(partials) / float(total)
    else:
        kernel = functools.partial(_focal_elem_kernel, alpha=float(alpha),
                                   gamma=float(gamma), logits=logits)
        out = pl.pallas_call(
            kernel,
            out_shape=jax.ShapeDtypeStruct((rows8, LANES), orig_dtype),
            grid_spec=pltpu.PrefetchScalarGridSpec(
                num_scalar_prefetch=0,
                grid=(num_tiles,),
                in_specs=[pl.BlockSpec((tile_rows, LANES), lambda i: (i, 0))] * 2,
                out_specs=pl.BlockSpec((tile_rows, LANES), lambda i: (i, 0)),
            ),
            compiler_params=pltpu.CompilerParams(
                dimension_semantics=("parallel",)),
        )(x2, t2)
        return out.reshape(-1)[:total].reshape(orig_shape)


def _focal_loss_ref(inputs, targets, alpha=1.0, gamma=2.0, logits=False, reduce=True):
    """Pure-JAX reference matching the PyTorch module."""
    x = inputs.astype(jnp.float32)
    t = targets.astype(jnp.float32)
    if logits:
        bce = jnp.maximum(x, 0.0) - x * t + jnp.log1p(jnp.exp(-jnp.abs(x)))
    else:
        logp = jnp.maximum(jnp.log(x), -100.0)
        log1mp = jnp.maximum(jnp.log(1.0 - x), -100.0)
        bce = -(t * logp + (1.0 - t) * log1mp)
    pt = jnp.exp(-bce)
    fl = alpha * (1.0 - pt) ** gamma * bce
    return jnp.mean(fl) if reduce else fl


if __name__ == "__main__":
    key = jax.random.PRNGKey(0)
    k1, k2, k3, k4, k5 = jax.random.split(key, 5)
    B, C, H, W = 2, 4, 16, 16

    # non-logits BCE requires probabilities in (0, 1)
    probs = jax.nn.sigmoid(jax.random.normal(k1, (B, C, H, W), jnp.float32))
    targets = jax.random.bernoulli(k2, 0.5, (B, C, H, W)).astype(jnp.float32)

    # reduce=True (default) path
    out = jax.block_until_ready(focal_loss(probs, targets, alpha=1.0, gamma=2.0,
                                           logits=False, reduce=True))
    ref = _focal_loss_ref(probs, targets, reduce=True)
    assert jnp.allclose(out, ref, rtol=1e-5, atol=1e-6), (out, ref)

    # reduce=False elementwise path (output in input dtype)
    out_elem = jax.block_until_ready(focal_loss(probs, targets, reduce=False))
    ref_elem = _focal_loss_ref(probs, targets, reduce=False)
    assert out_elem.shape == probs.shape and out_elem.dtype == probs.dtype
    assert jnp.allclose(out_elem, ref_elem, rtol=1e-5, atol=1e-6)

    # logits=True path
    logits_in = jax.random.normal(k3, (B, C, H, W), jnp.float32)
    out_lg = jax.block_until_ready(focal_loss(logits_in, targets, logits=True, reduce=True))
    ref_lg = _focal_loss_ref(logits_in, targets, logits=True, reduce=True)
    assert jnp.allclose(out_lg, ref_lg, rtol=1e-5, atol=1e-6), (out_lg, ref_lg)

    # ragged size (exercises jnp.pad + in-kernel iota tail mask)
    probs_r = jax.nn.sigmoid(jax.random.normal(k4, (2, 3, 7, 5), jnp.float32))
    targs_r = jax.random.bernoulli(k2, 0.5, (2, 3, 7, 5)).astype(jnp.float32)
    out_r = jax.block_until_ready(focal_loss(probs_r, targs_r, reduce=True))
    ref_r = _focal_loss_ref(probs_r, targs_r, reduce=True)
    assert jnp.allclose(out_r, ref_r, rtol=1e-5, atol=1e-6), (out_r, ref_r)

    # multi-tile + 2-chunk parallel reduction (small tile cap to force >1 tile)
    out_mt = jax.block_until_ready(focal_loss(probs, targets, reduce=True, max_tile_rows=8))
    assert jnp.allclose(out_mt, ref, rtol=1e-5, atol=1e-6), (out_mt, ref)
    out_mt_e = jax.block_until_ready(focal_loss(probs, targets, reduce=False, max_tile_rows=8))
    assert jnp.allclose(out_mt_e, ref_elem, rtol=1e-5, atol=1e-6)

    # partial last grid block WITHOUT any HBM padding copy (total % 1024 == 0,
    # rows not a multiple of tile_rows -> in-kernel mask handles the overhang)
    probs_p = jax.nn.sigmoid(jax.random.normal(k5, (2, 4, 16, 24), jnp.float32))
    targs_p = jax.random.bernoulli(k2, 0.5, (2, 4, 16, 24)).astype(jnp.float32)
    out_p = jax.block_until_ready(focal_loss(probs_p, targs_p, reduce=True, max_tile_rows=16))
    ref_p = _focal_loss_ref(probs_p, targs_p, reduce=True)
    assert jnp.allclose(out_p, ref_p, rtol=1e-5, atol=1e-6), (out_p, ref_p)
    out_pe = jax.block_until_ready(focal_loss(probs_p, targs_p, reduce=False, max_tile_rows=16))
    ref_pe = _focal_loss_ref(probs_p, targs_p, reduce=False)
    assert jnp.allclose(out_pe, ref_pe, rtol=1e-5, atol=1e-6)

    print("KERNEL_OK")
</pallas_src>

<mosaic_0001>
module attributes {stable_mosaic.version = 11 : i64} {
  func.func @_focal_sum_kernel(%arg0: i32, %arg1: i32, %arg2: memref<16x128xf32, #tpu.memory_space<vmem>>, %arg3: memref<16x128xf32, #tpu.memory_space<vmem>>, %arg4: memref<8x128xf32, #tpu.memory_space<vmem>>) attributes {dimension_semantics = [#tpu.dimension_semantics<parallel>, #tpu.dimension_semantics<arbitrary>], iteration_bounds = array<i64: 1, 1>, scalar_prefetch = 0 : i64, scratch_operands = 0 : i64, tpu.core_type = #tpu.core_type<tc>, window_params = [{transform_indices = @transform_0, window_bounds = array<i64: 16, 128>}, {transform_indices = @transform_1, window_bounds = array<i64: 16, 128>}, {transform_indices = @transform_2, window_bounds = array<i64: 8, 128>}]} {
    %c0_i32 = arith.constant 0 : i32
    %0 = arith.cmpi eq, %arg1, %c0_i32 : i32
    %1 = arith.extui %0 : i1 to i32
    %c0_i32_0 = arith.constant 0 : i32
    %2 = arith.cmpi ne, %1, %c0_i32_0 : i32
    scf.if %2 {
      %cst_16 = arith.constant 0.000000e+00 : f32
      %34 = vector.broadcast %cst_16 : f32 to vector<8x128xf32>
      %c0_17 = arith.constant 0 : index
      %c0_18 = arith.constant 0 : index
      %35 = vector.load %arg4[%c0_17, %c0_18] : memref<8x128xf32, #tpu.memory_space<vmem>>, vector<8x128xf32>
      tpu.vector_store %arg4[%c0_17, %c0_18], %34 {strides = array<i32>} : memref<8x128xf32, #tpu.memory_space<vmem>>, vector<8x128xf32>,
    } else {
    }
    %c0 = arith.constant 0 : index
    %c0_1 = arith.constant 0 : index
    %3 = vector.load %arg2[%c0, %c0_1] : memref<16x128xf32, #tpu.memory_space<vmem>>, vector<16x128xf32>
    %c0_2 = arith.constant 0 : index
    %c0_3 = arith.constant 0 : index
    %4 = vector.load %arg3[%c0_2, %c0_3] : memref<16x128xf32, #tpu.memory_space<vmem>>, vector<16x128xf32>
    %5 = math.log %3 : vector<16x128xf32>
    %cst = arith.constant -1.000000e+02 : f32
    %6 = vector.broadcast %cst : f32 to vector<16x128xf32>
    %7 = arith.maximumf %5, %6 : vector<16x128xf32>
    %cst_4 = arith.constant 1.000000e+00 : f32
    %8 = vector.broadcast %cst_4 : f32 to vector<16x128xf32>
    %9 = arith.subf %8, %3 : vector<16x128xf32>
    %10 = math.log %9 : vector<16x128xf32>
    %cst_5 = arith.constant -1.000000e+02 : f32
    %11 = vector.broadcast %cst_5 : f32 to vector<16x128xf32>
    %12 = arith.maximumf %10, %11 : vector<16x128xf32>
    %13 = arith.mulf %4, %7 : vector<16x128xf32>
    %cst_6 = arith.constant 1.000000e+00 : f32
    %14 = vector.broadcast %cst_6 : f32 to vector<16x128xf32>
    %15 = arith.subf %14, %4 : vector<16x128xf32>
    %16 = arith.mulf %15, %12 : vector<16x128xf32>
    %17 = arith.addf %13, %16 : vector<16x128xf32>
    %cst_7 = arith.constant 0.000000e+00 : f32
    %18 = vector.broadcast %cst_7 : f32 to vector<16x128xf32>
    %19 = arith.subf %18, %17 : vector<16x128xf32>
    %cst_8 = arith.constant 0.000000e+00 : f32
    %20 = vector.broadcast %cst_8 : f32 to vector<16x128xf32>
    %21 = arith.subf %20, %19 : vector<16x128xf32>
    %22 = math.exp %21 : vector<16x128xf32>
    %cst_9 = arith.constant 1.000000e+00 : f32
    %23 = vector.broadcast %cst_9 : f32 to vector<16x128xf32>
    %24 = arith.subf %23, %22 : vector<16x128xf32>
    %25 = arith.mulf %24, %24 : vector<16x128xf32>
    %cst_10 = arith.constant 1.000000e+00 : f32
    %26 = vector.broadcast %cst_10 : f32 to vector<16x128xf32>
    %27 = arith.mulf %26, %25 : vector<16x128xf32>
    %28 = arith.mulf %27, %19 : vector<16x128xf32>
    %c0_11 = arith.constant 0 : index
    %c0_12 = arith.constant 0 : index
    %29 = vector.load %arg4[%c0_11, %c0_12] : memref<8x128xf32, #tpu.memory_space<vmem>>, vector<8x128xf32>
    %30 = vector.shape_cast %28 : vector<16x128xf32> to vector<2x8x128xf32>
    %cst_13 = arith.constant dense<0.000000e+00> : vector<8x128xf32>
    %31 = vector.multi_reduction <add>, %30, %cst_13 [0] : vector<2x8x128xf32> to vector<8x128xf32>
    %32 = arith.addf %29, %31 : vector<8x128xf32>
    %c0_14 = arith.constant 0 : index
    %c0_15 = arith.constant 0 : index
    %33 = vector.load %arg4[%c0_14, %c0_15] : memref<8x128xf32, #tpu.memory_space<vmem>>, vector<8x128xf32>
    tpu.vector_store %arg4[%c0_14, %c0_15], %32 {strides = array<i32>} : memref<8x128xf32, #tpu.memory_space<vmem>>, vector<8x128xf32>,
    return
  }
  func.func @transform_0(%arg0: i32, %arg1: i32) -> (i32, i32) {
    %c1_i32 = arith.constant 1 : i32
    %0 = arith.muli %arg0, %c1_i32 : i32
    %1 = arith.addi %0, %arg1 : i32
    %c0_i32 = arith.constant 0 : i32
    %c0_i32_0 = arith.constant 0 : i32
    return %1, %c0_i32 : i32, i32
  }
  func.func @transform_1(%arg0: i32, %arg1: i32) -> (i32, i32) {
    %c1_i32 = arith.constant 1 : i32
    %0 = arith.muli %arg0, %c1_i32 : i32
    %1 = arith.addi %0, %arg1 : i32
    %c0_i32 = arith.constant 0 : i32
    %c0_i32_0 = arith.constant 0 : i32
    return %1, %c0_i32 : i32, i32
  }
  func.func @transform_2(%arg0: i32, %arg1: i32) -> (i32, i32) {
    %c0_i32 = arith.constant 0 : i32
    %c0_i32_0 = arith.constant 0 : i32
    return %arg0, %c0_i32 : i32, i32
  }
}

</mosaic_0001>

<llo_original>
// kernel: tpu_custom_call.1
$region0: #{tpu_custom_call.1}
  #allocation0 [shape = 'u32[]', space=smem, size = 0x4, offset = 0x4, fixed_abs, tag = 'smem constant byte address 0x4 - core index']
  #allocation1 [shape = 'u32[72,128]{1,0:T(1,128)}', space=vmem, size = 0x9000, scoped, tag = 'internal scratch']
  %s0 = inlined_call_operand.hbm [shape: f32[16,128], index: 0, kind: input, shape index: {}]
  %s1 = inlined_call_operand.hbm [shape: f32[16,128], index: 1, kind: input, shape index: {}]
  %s2 = inlined_call_operand.hbm [shape: f32[8,128], index: 2, kind: output, shape index: {}]
  %s3 = sld [smem:[#allocation0]]
  $region30: #{tpu_custom_call.1} parent=0
    _
  %s5 = ssub.s32 1, %s3
  %s6 = scalar_select 0, %s5, %s3
  $region1: #{tpu_custom_call.1} parent=0
    #allocation2 [shape = 'u8[8192]{0}', space=vmem, size = 0x2000, scoped, tag = 'input window, operand 0, single buffered']
    #allocation3 [shape = 's32[1]{0}', space=sflag, size = 0x4, scoped, tag = 'scoped memory for tpu_custom_call.1']
    #allocation4 [shape = 's32[1]{0}', space=sflag, size = 0x4, scoped, tag = 'scoped memory for tpu_custom_call.1']
    #allocation5 [shape = 'u8[8192]{0}', space=vmem, size = 0x2000, scoped, tag = 'input window, operand 1, single buffered']
    #allocation6 [shape = 's32[1]{0}', space=sflag, size = 0x4, scoped, tag = 'scoped memory for tpu_custom_call.1']
    #allocation7 [shape = 'u8[4096]{0}', space=vmem, size = 0x1000, scoped, tag = 'output window, operand 0, single buffered']
    %7 = vsyncpa [#allocation3], 0
    %8 = vsyncpa [#allocation6], 0
    %9 = vsyncpa [#allocation4], 0
    // Predicated region
    $region2: #{tpu_custom_call.1} parent=1 // pred_check
      _
    $region3: #{tpu_custom_call.1} parent=1 // pred_check_branch
      %11 = sbr.rel (0) target = $region5
    $region4: #{tpu_custom_call.1} parent=1 // pred_region
      %s12 = sadd.s32 0, 0
      %s13 = smul.u32 2, %s12
      %15 = vsyncadd [#allocation3], 0
      %s16 = smul.addr %s13, 8
      %s17 = scalar_lea.hbm %s0, %s16
      %s18 = sshll.u32 %s17, 4
      %s19 = int_to_ptr.hbm [resolvable:$true] %s18
      %s20 = sshll.u32 [#allocation2], 4
      %s21 = int_to_ptr.vmem [resolvable:$true] %s20
      %26 = dma.hbm_to_vmem [thread:$0]  %s19, 256, %s21, [#allocation3], 128, 128, 8
    $region5: #{tpu_custom_call.1} parent=1 // pred_fallthru
      _
    // Predicated region
    $region6: #{tpu_custom_call.1} parent=1 // pred_check
      _
    $region7: #{tpu_custom_call.1} parent=1 // pred_check_branch
      %28 = sbr.rel (0) target = $region9
    $region8: #{tpu_custom_call.1} parent=1 // pred_region
      %s29 = sadd.s32 0, 0
      %s30 = smul.u32 2, %s29
      %32 = vsyncadd [#allocation6], 0
      %s33 = smul.addr %s30, 8
      %s34 = scalar_lea.hbm %s1, %s33
      %s35 = sshll.u32 %s34, 4
      %s36 = int_to_ptr.hbm [resolvable:$true] %s35
      %s37 = sshll.u32 [#allocation5], 4
      %s38 = int_to_ptr.vmem [resolvable:$true] %s37
      %43 = dma.hbm_to_vmem [thread:$0]  %s36, 256, %s38, [#allocation6], 128, 128, 8
    $region9: #{tpu_custom_call.1} parent=1 // pred_fallthru
      _
    // Predicated region
    $region10: #{tpu_custom_call.1} parent=1 // pred_check
      _
    $region11: #{tpu_custom_call.1} parent=1 // pred_check_branch
      %45 = sbr.rel (0) target = $region13
    $region12: #{tpu_custom_call.1} parent=1 // pred_region
      %47 = dma.done [#allocation3], 256
    $region13: #{tpu_custom_call.1} parent=1 // pred_fallthru
      _
    // Predicated region
    $region14: #{tpu_custom_call.1} parent=1 // pred_check
      _
    $region15: #{tpu_custom_call.1} parent=1 // pred_check_branch
      %49 = sbr.rel (0) target = $region17
    $region16: #{tpu_custom_call.1} parent=1 // pred_region
      %51 = dma.done [#allocation6], 256
    $region17: #{tpu_custom_call.1} parent=1 // pred_fallthru
      _
    %s52 = sadd.s32 0, 0
    %s53 = smul.u32 2, %s52
    %s54 = sadd.s32 0, 0
    %s55 = smul.u32 2, %s54
    %p56 = scmp.eq.s32.totalorder 0, 0
    // Predicated region
    $region18: #{tpu_custom_call.1} parent=1 // pred_check
      %p57 = pneg %p56
    $region19: #{tpu_custom_call.1} parent=1 // pred_check_branch
      %59 = sbr.rel (%p57) target = $region21
    $region20: #{tpu_custom_call.1} parent=1 // pred_region
      %60 = vst [vmem:[#allocation7] sm:$0xff] 0.0
    $region21: #{tpu_custom_call.1} parent=1 // pred_fallthru
      _
    %v61 = vld [vmem:[#allocation2] sm:$0xff]
    %v62 = vld [vmem:[#allocation2 + $0x8] sm:$0xff]
    %v63 = vld [vmem:[#allocation5] sm:$0xff]
    %v64 = vld [vmem:[#allocation5 + $0x8] sm:$0xff]
    %v65 = vlog2.pop %v61
    %v66 = vmul.f32 %v65, 0.6931472
    %v67 = vlog2.pop %v62
    %v68 = vmul.f32 %v67, 0.6931472
    %v69 = vmax.f32 %v66, -100.0
    %v70 = vmax.f32 %v68, -100.0
    %v71 = vsub.f32 1.0, %v61
    %v72 = vsub.f32 1.0, %v62
    %v73 = vlog2.pop %v71
    %v74 = vmul.f32 %v73, 0.6931472
    %v75 = vlog2.pop %v72
    %v76 = vmul.f32 %v75, 0.6931472
    %v77 = vmax.f32 %v74, -100.0
    %v78 = vmax.f32 %v76, -100.0
    %v79 = vmul.f32 %v63, %v69
    %v80 = vmul.f32 %v64, %v70
    %v81 = vsub.f32 1.0, %v63
    %v82 = vsub.f32 1.0, %v64
    %v83 = vmul.f32 %v81, %v77
    %v84 = vmul.f32 %v82, %v78
    %v85 = vadd.f32 %v79, %v83
    %v86 = vadd.f32 %v80, %v84
    %v87 = vsub.f32 0.0, %v85
    %v88 = vsub.f32 0.0, %v86
    %v89 = vsub.f32 0.0, %v87
    %v90 = vsub.f32 0.0, %v88
    %v91 = vmul.f32 %v89, 1.442695
    %v92 = vpow.pop %v91
    %v93 = vmul.f32 %v90, 1.442695
    %v94 = vpow.pop %v93
    %v95 = vsub.f32 1.0, %v92
    %v96 = vsub.f32 1.0, %v94
    %v97 = vmul.f32 %v95, %v95
    %v98 = vmul.f32 %v96, %v96
    %v99 = vmul.f32 %v97, %v87
    %v100 = vmul.f32 %v98, %v88
    %v101 = vld [vmem:[#allocation7] sm:$0xff]
    %v102 = vadd.f32 %v99, %v100
    %v103 = vadd.f32 %v101, %v102
    %104 = vst [vmem:[#allocation7] sm:$0xff] %v103
    // Predicated region
    $region22: #{tpu_custom_call.1} parent=1 // pred_check
      _
    $region23: #{tpu_custom_call.1} parent=1 // pred_check_branch
      %106 = sbr.rel (0) target = $region25
    $region24: #{tpu_custom_call.1} parent=1 // pred_region
      %108 = vsyncadd [#allocation4], 0
      %s110 = sshll.u32 [#allocation7], 4
      %s111 = int_to_ptr.vmem [resolvable:$true] %s110
      %s112 = sshll.u32 %s2, 4
      %s113 = int_to_ptr.hbm [resolvable:$true] %s112
      %115 = dma.vmem_to_hbm [thread:$0]  %s111, 128, %s113, [#allocation4]
    $region25: #{tpu_custom_call.1} parent=1 // pred_fallthru
      _
    // Predicated region
    $region26: #{tpu_custom_call.1} parent=1 // pred_check
      _
    $region27: #{tpu_custom_call.1} parent=1 // pred_check_branch
      %117 = sbr.rel (0) target = $region29
    $region28: #{tpu_custom_call.1} parent=1 // pred_region
      %119 = dma.done [#allocation4], 128
    $region29: #{tpu_custom_call.1} parent=1 // pred_fallthru
      _
    %120 = vsyncpa [#allocation3], 1
    %121 = vsyncpa [#allocation6], 1
    %122 = vsyncpa [#allocation4], 1

</llo_original>
